<compile_context>
chip_gen: v7x
topology: tpu7x:2x2x1
jax: 0.10.0
libtpu: 0.0.40
codegen_flags: <defaults>
</compile_context>

<pallas_src>
import jax
import jax.numpy as jnp
from jax.experimental import pallas as pl
from jax.experimental.pallas import tpu as pltpu


_TARGET_BLOCK_BYTES = 2 * 1024 * 1024   # ~2 MiB blocks: >85% of HBM BW; 8 MiB
                                        # double-buffered in+out footprint fits
                                        # every generation's default scoped VMEM.
_MIN_GRID_STEPS = 8                     # keep both v7x TensorCores busy.


def _sublane_packing(itemsize):
    """Native sublane packing of the second-minor dim: 8 f32, 16 bf16, 32 int8."""
    return max(8, 32 // itemsize)


# ---------------------------------------------------------------------------
# Kernels
# ---------------------------------------------------------------------------

def _copy_block_kernel(x_ref, o_ref):
    # Channel reversal is done by the input BlockSpec index_map; this body is a
    # pure full-width copy (unmasked vld/vst), so the kernel stays HBM-bound.
    o_ref[...] = x_ref[...]


def _flip_channels_in_block_kernel(x_ref, o_ref):
    # x_ref / o_ref: (1, cb, ts) VMEM tiles.  Channel *blocks* were already
    # reversed by the index_map; reverse the cb channels inside the block with
    # one whole-block register shuffle.  One full-width load and one full-width
    # store per block; the sublane permute runs on the XLU/VPU and hides under
    # the block DMAs (instead of the previous 1-sublane masked stores).
    v = x_ref[...]
    cb = v.shape[1]
    if cb == 1:
        o_ref[...] = v
    else:
        o_ref[...] = jnp.concatenate(
            [v[:, j:j + 1, :] for j in range(cb - 1, -1, -1)], axis=1)


# ---------------------------------------------------------------------------
# Tiling helpers
# ---------------------------------------------------------------------------

def _pick_row_tile(n_rows, itemsize, other_steps):
    """Row tile (second-minor) for the lane-aligned path; rows are 128 lanes."""
    sub = _sublane_packing(itemsize)
    budget = max(sub, (_TARGET_BLOCK_BYTES // (128 * itemsize)) // sub * sub)
    tr = n_rows if n_rows <= budget else budget
    # Megacore: keep enough grid steps so both v7x TensorCores get several.
    while tr > sub and other_steps * (-(-n_rows // tr)) < _MIN_GRID_STEPS:
        tr = max(sub, (tr // 2) // sub * sub)
    return tr


def _pick_channel_block(c, itemsize):
    """Channel block: native sublane packing if it divides C, else full C
    (always layout-legal because it equals the full array dim)."""
    p = _sublane_packing(itemsize)
    return p if c % p == 0 else c


def _pick_spatial_tile(hw, cb, itemsize, other_steps):
    """Lane tile for the non-aligned path: multiple of 128 (or the full hw)."""
    if hw <= 128:
        return hw
    max_elems = max(128, (_TARGET_BLOCK_BYTES // (cb * itemsize)) // 128 * 128)
    if hw * cb * itemsize <= _TARGET_BLOCK_BYTES:
        ts = hw                                   # single block; full-dim is legal
    else:
        ts = min((hw // 128) * 128, max_elems)    # cdiv grid; last block masked
    while ts > 256 and other_steps * (-(-hw // ts)) < _MIN_GRID_STEPS:
        ts = max(128, (ts // 2) // 128 * 128)
    return ts


# ---------------------------------------------------------------------------
# Public wrapper
# ---------------------------------------------------------------------------

def feature_flip_block(x, axis=1, *, min_pallas_bytes=1 << 20):
    """Pallas equivalent of FeatureFlipBlock(axis=1).forward(x) for NCHW x."""
    assert axis == 1, "kernel implements the module's default axis=1 (channel flip)"
    assert x.ndim == 4, "expects NCHW conv-feature input"
    N, C, H, W = x.shape
    HW = H * W
    itemsize = jnp.dtype(x.dtype).itemsize
    nbytes = x.size * itemsize

    # Below ~1 MiB the per-grid-step (~0.35 us) + launch overhead dominates;
    # XLA's fused flip is at least as fast there.
    if nbytes < min_pallas_bytes or N == 0 or C == 0 or HW == 0:
        return jnp.flip(x, axis=1)

    cost = pl.CostEstimate(flops=0, transcendentals=0, bytes_accessed=2 * nbytes)
    params = pltpu.CompilerParams(
        dimension_semantics=("parallel", "parallel", "parallel"))

    if HW % 128 == 0:
        # Lane-aligned path: view spatial as (rows, 128) so the channel axis is
        # outside the last two dims; the flip lives purely in the index_map and
        # the kernel is a full-width copy (no sublane shuffles, no masking).
        R = HW // 128
        tr = _pick_row_tile(R, itemsize, other_steps=N * C)
        n_r = -(-R // tr)
        x4 = x.reshape(N, C, R, 128)              # free, contiguous reshape
        out = pl.pallas_call(
            _copy_block_kernel,
            out_shape=jax.ShapeDtypeStruct((N, C, R, 128), x.dtype),
            grid=(N, C, n_r),
            in_specs=[pl.BlockSpec((1, 1, tr, 128),
                                   lambda n, c, r: (n, C - 1 - c, r, 0))],
            out_specs=pl.BlockSpec((1, 1, tr, 128),
                                   lambda n, c, r: (n, c, r, 0)),
            compiler_params=params,
            cost_estimate=cost,
        )(x4)
        return out.reshape(N, C, H, W)

    # Non-lane-aligned fallback: reverse channel *blocks* via the index_map and
    # the channels inside a block with one whole-block register shuffle.
    cb = _pick_channel_block(C, itemsize)
    n_cb = C // cb
    ts = _pick_spatial_tile(HW, cb, itemsize, other_steps=N * n_cb)
    n_ts = -(-HW // ts)
    x3 = x.reshape(N, C, HW)                      # free, contiguous reshape
    out = pl.pallas_call(
        _flip_channels_in_block_kernel,
        out_shape=jax.ShapeDtypeStruct((N, C, HW), x.dtype),
        grid=(N, n_cb, n_ts),
        in_specs=[pl.BlockSpec((1, cb, ts),
                               lambda n, c, s: (n, n_cb - 1 - c, s))],
        out_specs=pl.BlockSpec((1, cb, ts), lambda n, c, s: (n, c, s)),
        compiler_params=params,
        cost_estimate=cost,
    )(x3)
    return out.reshape(N, C, H, W)


if __name__ == "__main__":
    key = jax.random.PRNGKey(0)
    k1, k2, k3 = jax.random.split(key, 3)

    # Small NCHW conv-feature input; min_pallas_bytes=0 forces the Pallas path
    # so the kernel itself (not the small-input jnp.flip dispatch) is exercised.
    x = jax.random.normal(k1, (2, 4, 16, 16), dtype=jnp.float32)
    out = jax.block_until_ready(feature_flip_block(x, axis=1, min_pallas_bytes=0))
    assert out.shape == x.shape and out.dtype == x.dtype
    assert jnp.array_equal(out, jnp.flip(x, axis=1)), "flip mismatch (C=4)"

    # More channels (index_map reversal over a larger channel grid axis).
    x2 = jax.random.normal(k2, (2, 16, 16, 16), dtype=jnp.float32)
    out2 = jax.block_until_ready(feature_flip_block(x2, axis=1, min_pallas_bytes=0))
    assert jnp.array_equal(out2, jnp.flip(x2, axis=1)), "flip mismatch (C=16)"

    # bf16 input (exercises the dtype-aware tiling logic).
    x3 = jax.random.normal(k3, (2, 32, 16, 16), dtype=jnp.float32).astype(jnp.bfloat16)
    out3 = jax.block_until_ready(feature_flip_block(x3, axis=1, min_pallas_bytes=0))
    assert jnp.array_equal(out3, jnp.flip(x3, axis=1)), "flip mismatch (bf16)"

    print("KERNEL_OK")
</pallas_src>

<mosaic_0001>
module attributes {stable_mosaic.version = 11 : i64} {
  func.func @_copy_block_kernel(%arg0: i32, %arg1: i32, %arg2: i32, %arg3: memref<1x1x2x128xf32, #tpu.memory_space<vmem>>, %arg4: memref<1x1x2x128xf32, #tpu.memory_space<vmem>>) attributes {dimension_semantics = [#tpu.dimension_semantics<parallel>, #tpu.dimension_semantics<parallel>, #tpu.dimension_semantics<parallel>], iteration_bounds = array<i64: 2, 4, 1>, scalar_prefetch = 0 : i64, scratch_operands = 0 : i64, tpu.core_type = #tpu.core_type<tc>, window_params = [{transform_indices = @transform_0, window_bounds = array<i64: 1, 1, 2, 128>}, {transform_indices = @transform_1, window_bounds = array<i64: 1, 1, 2, 128>}]} {
    %c0 = arith.constant 0 : index
    %c0_0 = arith.constant 0 : index
    %c0_1 = arith.constant 0 : index
    %c0_2 = arith.constant 0 : index
    %0 = vector.load %arg3[%c0, %c0_0, %c0_1, %c0_2] : memref<1x1x2x128xf32, #tpu.memory_space<vmem>>, vector<1x1x2x128xf32>
    %c0_3 = arith.constant 0 : index
    %c0_4 = arith.constant 0 : index
    %c0_5 = arith.constant 0 : index
    %c0_6 = arith.constant 0 : index
    %1 = vector.load %arg4[%c0_3, %c0_4, %c0_5, %c0_6] : memref<1x1x2x128xf32, #tpu.memory_space<vmem>>, vector<1x1x2x128xf32>
    tpu.vector_store %arg4[%c0_3, %c0_4, %c0_5, %c0_6], %0 {strides = array<i32>} : memref<1x1x2x128xf32, #tpu.memory_space<vmem>>, vector<1x1x2x128xf32>,
    return
  }
  func.func @transform_0(%arg0: i32, %arg1: i32, %arg2: i32) -> (i32, i32, i32, i32) {
    %c3_i32 = arith.constant 3 : i32
    %0 = arith.subi %c3_i32, %arg1 : i32
    %c0_i32 = arith.constant 0 : i32
    %c0_i32_0 = arith.constant 0 : i32
    return %arg0, %0, %arg2, %c0_i32 : i32, i32, i32, i32
  }
  func.func @transform_1(%arg0: i32, %arg1: i32, %arg2: i32) -> (i32, i32, i32, i32) {
    %c0_i32 = arith.constant 0 : i32
    %c0_i32_0 = arith.constant 0 : i32
    return %arg0, %arg1, %arg2, %c0_i32 : i32, i32, i32, i32
  }
}

</mosaic_0001>

<llo_original>
// kernel: tpu_custom_call.1
$region0: #{tpu_custom_call.1}
  #allocation0 [shape = 'u32[]', space=smem, size = 0x4, offset = 0x4, fixed_abs, tag = 'smem constant byte address 0x4 - core index']
  #allocation1 [shape = 'u32[144,128]{1,0:T(1,128)}', space=vmem, size = 0x12000, scoped, tag = 'internal scratch']
  %s0 = inlined_call_operand.hbm [shape: f32[2,4,2,128], index: 0, kind: input, shape index: {}]
  %s1 = inlined_call_operand.hbm [shape: f32[2,4,2,128], index: 1, kind: output, shape index: {}]
  %s2 = sld [smem:[#allocation0]]
  $region41: #{tpu_custom_call.1} parent=0
    _
  %s4 = ssub.s32 1, %s2
  %s5 = scalar_select 0, %s4, %s2
  $region1: #{tpu_custom_call.1} parent=0
    #allocation2 [shape = 'u8[2048]{0}', space=vmem, size = 0x800, scoped, tag = 'input window, operand 0']
    #allocation3 [shape = 's32[2]{0}', space=sflag, size = 0x8, scoped, tag = 'scoped memory for tpu_custom_call.1']
    #allocation4 [shape = 's32[2]{0}', space=sflag, size = 0x8, scoped, tag = 'scoped memory for tpu_custom_call.1']
    #allocation5 [shape = 'u8[2048]{0}', space=vmem, size = 0x800, scoped, tag = 'output window, operand 0']
    %6 = vsyncpa [#allocation3], 0
    %s7 = scalar_lea.sflag [#allocation3], 1
    %8 = vsyncpa %s7, 0
    %9 = vsyncpa [#allocation4], 0
    %s10 = scalar_lea.sflag [#allocation4], 1
    %11 = vsyncpa %s10, 0
    loop: start=0, step=1, limit=10
    $region2: #{tpu_custom_call.1} parent=1 // loop_pre_header
      _
    $region3: #{tpu_custom_call.1} parent=1 // loop_header
      %s13 = sphi 0, %s17
      %p14 = scmp.ge.s32.totalorder %s13, 10
      %s20 = sphi 0, %s39
      %s21 = sphi 0, %s35
      %s22 = sphi 0, %s31
      %s23 = sphi 0, %s20
      %s24 = sphi 0, %s21
      %s25 = sphi 0, %s22
      %s26 = sphi 0, %s23
      %s27 = sphi 0, %s24
      %s28 = sphi 0, %s25
      %s48 = sphi 0, %s50
      %s51 = sphi 0, %s48
      %s52 = sphi 0, %s51
      %s68 = sphi 0, %s52
      %s78 = sphi 0, %s80
      %s81 = sphi 0, %s78
      %s82 = sphi 0, %s81
      %s98 = sphi 0, %s82
    $region4: #{tpu_custom_call.1} parent=1 // loop_header_branch
      %16 = sbr.rel (%p14) target = $region8
    $region5: #{tpu_custom_call.1} parent=1 // loop_body
      %s18 = ssub.s32 %s13, 1
      %s19 = ssub.s32 %s13, 2
      %s29 = sadd.s32 1, %s22
      %p30 = scmp.ge.s32.totalorder %s29, 1
      %s31 = scalar_select %p30, 0, %s29
      %s32 = sadd.s32 1, %s21
      %s33 = scalar_select %p30, %s32, %s21
      %p34 = scmp.ge.s32.totalorder %s33, 4
      %s35 = scalar_select %p34, 0, %s33
      %s36 = sadd.s32 1, %s20
      %s37 = scalar_select %p34, %s36, %s20
      %p38 = scmp.ge.s32.totalorder %s37, 2
      %s39 = scalar_select %p38, 0, %s37
      %s40 = ssub.s32 3, %s21
      %s41 = ssub.s32 3, %s35
      %s42 = ssub.s32 %s20, %s39
      %s43 = ssub.s32 %s40, %s41
      %s44 = sor.u32 %s42, %s43
      %s45 = ssub.s32 %s22, %s31
      %s46 = sor.u32 %s44, %s45
      %p47 = scmp.eq.s32.totalorder %s46, 0
      %s49 = sadd.s32 %s48, 1
      %s50 = scalar_select %p47, %s48, %s49
      %p53 = pneg %p47
      %p54 = scmp.eq.s32.totalorder %s13, 7
      %p55 = por %p53, %p54
      %p56 = scmp.ne.s32.totalorder %s48, %s51
      %p57 = scmp.eq.s32.totalorder %s13, 0
      %p58 = por %p56, %p57
      %p59 = scmp.ne.s32.totalorder %s48, %s51
      %p60 = scmp.eq.s32.totalorder %s18, 7
      %p61 = por %p59, %p60
      %p62 = scmp.ne.s32.totalorder %s51, %s52
      %p63 = scmp.eq.s32.totalorder %s18, 0
      %p64 = por %p62, %p63
      %p65 = scmp.ne.s32.totalorder %s51, %s52
      %p66 = scmp.eq.s32.totalorder %s19, 7
      %p67 = por %p65, %p66
      %p69 = scmp.ne.s32.totalorder %s52, %s68
      %p70 = scmp.eq.s32.totalorder %s19, 0
      %p71 = por %p69, %p70
      %s72 = ssub.s32 %s20, %s39
      %s73 = ssub.s32 %s21, %s35
      %s74 = sor.u32 %s72, %s73
      %s75 = ssub.s32 %s22, %s31
      %s76 = sor.u32 %s74, %s75
      %p77 = scmp.eq.s32.totalorder %s76, 0
      %s79 = sadd.s32 %s78, 1
      %s80 = scalar_select %p77, %s78, %s79
      %p83 = pneg %p77
      %p84 = scmp.eq.s32.totalorder %s13, 7
      %p85 = por %p83, %p84
      %p86 = scmp.ne.s32.totalorder %s78, %s81
      %p87 = scmp.eq.s32.totalorder %s13, 0
      %p88 = por %p86, %p87
      %p89 = scmp.ne.s32.totalorder %s78, %s81
      %p90 = scmp.eq.s32.totalorder %s18, 7
      %p91 = por %p89, %p90
      %p92 = scmp.ne.s32.totalorder %s81, %s82
      %p93 = scmp.eq.s32.totalorder %s18, 0
      %p94 = por %p92, %p93
      %p95 = scmp.ne.s32.totalorder %s81, %s82
      %p96 = scmp.eq.s32.totalorder %s19, 7
      %p97 = por %p95, %p96
      %p99 = scmp.ne.s32.totalorder %s82, %s98
      %p100 = scmp.eq.s32.totalorder %s19, 0
      %p101 = por %p99, %p100
      %p102 = scmp.le.s32.totalorder 1, %s13
      %p103 = scmp.lt.s32.totalorder %s13, 9
      %p104 = pnand %p102, %p103
      %p105 = pneg %p104
      // Predicated region
      $region9: #{tpu_custom_call.1} parent=5 // pred_check
        _
      $region10: #{tpu_custom_call.1} parent=5 // pred_check_branch
        %107 = sbr.rel (%p104) target = $region12
      $region11: #{tpu_custom_call.1} parent=5 // pred_region
        %s108 = ssub.s32 %s13, 1
      $region12: #{tpu_custom_call.1} parent=5 // pred_fallthru
        _
      %p109 = scmp.lt.s32.totalorder %s13, 8
      // Predicated region
      $region13: #{tpu_custom_call.1} parent=5 // pred_check
        %p110 = pneg %p109
      $region14: #{tpu_custom_call.1} parent=5 // pred_check_branch
        %112 = sbr.rel (%p110) target = $region16
      $region15: #{tpu_custom_call.1} parent=5 // pred_region
        // Predicated region
        $region17: #{tpu_custom_call.1} parent=15 // pred_check
          %p113 = pneg %p58
        $region18: #{tpu_custom_call.1} parent=15 // pred_check_branch
          %115 = sbr.rel (%p113) target = $region20
        $region19: #{tpu_custom_call.1} parent=15 // pred_region
          %s116 = sand.u32 %s48, 1
          %s117 = scalar_lea.sflag [#allocation3], %s116
          %s118 = sand.u32 %s48, 1
          %s119 = smul.addr %s118, 2
          %s120 = scalar_lea.vmem [#allocation2], %s119
          %s121 = ssub.s32 3, %s21
          %s123 = ssub.s32 32, 32
          %124 = vsyncadd %s117, %s123
          %s125 = sadd.s32 %s22, %s121
          %s126 = smul.addr %s20, 4
          %s127 = sadd.s32 %s125, %s126
          %s128 = smul.addr %s127, 32
          %s129 = scalar_lea.hbm %s0, %s128
          %s131 = sshll.u32 %s120, 4
          %s132 = int_to_ptr.vmem [resolvable:$true] %s131
          %134 = dma.hbm_to_vmem [thread:$0]  %s129, 32, %s132, %s117
        $region20: #{tpu_custom_call.1} parent=15 // pred_fallthru
          _
      $region16: #{tpu_custom_call.1} parent=5 // pred_fallthru
        _
      %p135 = scmp.le.s32.totalorder 1, %s13
      %p136 = scmp.lt.s32.totalorder %s13, 9
      %p137 = pnand %p135, %p136
      %p138 = pneg %p137
      // Predicated region
      $region21: #{tpu_custom_call.1} parent=5 // pred_check
        _
      $region22: #{tpu_custom_call.1} parent=5 // pred_check_branch
        %140 = sbr.rel (%p137) target = $region24
      $region23: #{tpu_custom_call.1} parent=5 // pred_region
        %s141 = ssub.s32 %s13, 1
        %s142 = sand.u32 %s51, 1
        %s143 = scalar_lea.sflag [#allocation3], %s142
        %s144 = sand.u32 %s51, 1
        %s145 = smul.addr %s144, 2
        %s146 = scalar_lea.vmem [#allocation2], %s145
        // Predicated region
        $region25: #{tpu_custom_call.1} parent=23 // pred_check
          %p147 = pneg %p64
        $region26: #{tpu_custom_call.1} parent=23 // pred_check_branch
          %149 = sbr.rel (%p147) target = $region28
        $region27: #{tpu_custom_call.1} parent=23 // pred_region
          %150 = dma.done %s143, 32
        $region28: #{tpu_custom_call.1} parent=23 // pred_fallthru
          _
        %s151 = sand.u32 %s51, 1
        %s152 = scalar_lea.sflag [#allocation3], %s151
        %s153 = sand.u32 %s51, 1
        %s154 = smul.addr %s153, 2
        %s155 = scalar_lea.vmem [#allocation2], %s154
        %p156 = pneg %p64
        %p157 = pneg %p61
        %p158 = pneg %p94
        %p159 = pneg %p91
        %s160 = sand.u32 %s81, 1
        %s161 = scalar_lea.sflag [#allocation4], %s160
        %s162 = sand.u32 %s81, 1
        %s163 = smul.addr %s162, 2
        %s164 = scalar_lea.vmem [#allocation5], %s163
        %s165 = ssub.s32 3, %s24
        %v166 = vld [vmem:[%s146] sm:$0x3]
        %167 = vst [vmem:[%s164] sm:$0x3] %v166
        %s168 = sand.u32 %s81, 1
        %s169 = scalar_lea.sflag [#allocation4], %s168
        %s170 = sand.u32 %s81, 1
        %s171 = smul.addr %s170, 2
        %s172 = scalar_lea.vmem [#allocation5], %s171
        // Predicated region
        $region29: #{tpu_custom_call.1} parent=23 // pred_check
          %p173 = pneg %p91
        $region30: #{tpu_custom_call.1} parent=23 // pred_check_branch
          %175 = sbr.rel (%p173) target = $region32
        $region31: #{tpu_custom_call.1} parent=23 // pred_region
          %s177 = ssub.s32 32, 32
          %178 = vsyncadd %s169, %s177
          %s179 = sadd.s32 %s25, %s24
          %s180 = smul.addr %s23, 4
          %s181 = sadd.s32 %s179, %s180
          %s182 = smul.addr %s181, 32
          %s183 = scalar_lea.hbm %s1, %s182
          %s185 = sshll.u32 %s172, 4
          %s186 = int_to_ptr.vmem [resolvable:$true] %s185
          %188 = dma.vmem_to_hbm [thread:$0]  %s186, 32, %s183, %s169
        $region32: #{tpu_custom_call.1} parent=23 // pred_fallthru
          _
      $region24: #{tpu_custom_call.1} parent=5 // pred_fallthru
        _
      %p189 = scmp.le.s32.totalorder 2, %s13
      // Predicated region
      $region33: #{tpu_custom_call.1} parent=5 // pred_check
        %p190 = pneg %p189
      $region34: #{tpu_custom_call.1} parent=5 // pred_check_branch
        %192 = sbr.rel (%p190) target = $region36
      $region35: #{tpu_custom_call.1} parent=5 // pred_region
        %s193 = ssub.s32 %s13, 2
        // Predicated region
        $region37: #{tpu_custom_call.1} parent=35 // pred_check
          %p194 = pneg %p97
        $region38: #{tpu_custom_call.1} parent=35 // pred_check_branch
          %196 = sbr.rel (%p194) target = $region40
        $region39: #{tpu_custom_call.1} parent=35 // pred_region
          %s197 = sand.u32 %s82, 1
          %s198 = scalar_lea.sflag [#allocation4], %s197
          %s199 = sand.u32 %s82, 1
          %s200 = smul.addr %s199, 2
          %s201 = scalar_lea.vmem [#allocation5], %s200
          %202 = dma.done %s198, 32
        $region40: #{tpu_custom_call.1} parent=35 // pred_fallthru
          _
      $region36: #{tpu_custom_call.1} parent=5 // pred_fallthru
        _
    $region6: #{tpu_custom_call.1} parent=1 // loop_footer
      %s17 = sadd.s32 1, %s13
    $region7: #{tpu_custom_call.1} parent=1 // loop_footer_branch
      %12 = sbr.rel target = $region3
    $region8: #{tpu_custom_call.1} parent=1 // loop_exit
      _
    %203 = vsyncpa [#allocation3], 1
    %s204 = scalar_lea.sflag [#allocation3], 1
    %205 = vsyncpa %s204, 1
    %206 = vsyncpa [#allocation4], 1
    %s207 = scalar_lea.sflag [#allocation4], 1
    %208 = vsyncpa %s207, 1

</llo_original>
